<compile_context>
chip_gen: v7x
topology: tpu7x:2x2x1
jax: 0.10.0
libtpu: 0.0.40
codegen_flags: <defaults>
</compile_context>

<pallas_src>
import functools

import jax
import jax.numpy as jnp
from jax.experimental import pallas as pl
from jax.experimental.pallas import tpu as pltpu


# ---------------------------------------------------------------------------
# Layout helper.
# (B, C, S) -> (B * rows_per_batch, 128): C-major flatten, S padded to a power
# of two, per-batch width padded to a multiple of 128.  All reshapes are
# contiguous (no transpose) so XLA lowers them without copies; padding only
# happens when S is not a power of two or C*S_pad is not a multiple of 128
# (never for the shapes in this test).  Zero padding is harmless: padded
# positions are zero in both fake and real, so they contribute 0 to the masked
# sum whether the mask selects them or not.
# ---------------------------------------------------------------------------
def _lane_dense_rows(t):
    b, c, s = t.shape
    s_pad = int(pl.next_power_of_2(s))
    if s_pad != s:
        t = jnp.pad(t, ((0, 0), (0, 0), (0, s_pad - s)))
    w = c * s_pad
    x = t.reshape(b, w)
    w_pad = -(-w // 128) * 128
    if w_pad != w:
        x = jnp.pad(x, ((0, 0), (0, w_pad - w)))
    rows_per_batch = w_pad // 128
    return x.reshape(b * rows_per_batch, 128), s_pad, rows_per_batch


# ---------------------------------------------------------------------------
# In-kernel helper: whole-tile masked sum of a (rows, 128) f32 tile.
# Row r belongs to batch r // rows_per_batch; the sample index of (row, lane)
# is the flat position inside that batch's flattened (C, S_pad) data mod S_pad.
# S_pad is a power of two, so the mod is a bitwise AND with a static constant.
# ---------------------------------------------------------------------------
def _masked_sum(d, len_ref, len_base, batch, s_pad, rows_per_batch,
                lane_iota, row_iota):
    rows = batch * rows_per_batch
    if s_pad <= 128:                                   # S_pad divides 128
        samp = lane_iota & (s_pad - 1)                 # (1, 128)
    else:                                              # 128 divides S_pad
        sub = s_pad // 128
        samp = (row_iota & (sub - 1)) * 128 + lane_iota  # (rows, 128)
    # Per-row length column via a vectorized select chain over the small batch
    # (no sublane slicing, no per-batch reductions, no serial scalar chain).
    row_len = jnp.full((rows, 1), len_ref[len_base], jnp.int32)
    for b in range(1, batch):
        row_len = jnp.where(row_iota >= b * rows_per_batch,
                            jnp.full((rows, 1), len_ref[len_base + b], jnp.int32),
                            row_len)
    mask = samp < row_len                              # (rows, 128)
    return jnp.sum(jnp.where(mask, d, 0.0))            # single reduction


# ---------------------------------------------------------------------------
# Fused kernel: one invocation processes all L feature maps (static unroll).
# ---------------------------------------------------------------------------
def _feature_loss_kernel(len_ref, *refs, metas, batch, wt):
    """len_ref: SMEM (L*batch,) int32 valid lengths.
       refs:    L fake refs, L real refs (each (rows_j, 128)), then out_ref."""
    n = len(metas)
    fake_refs = refs[:n]
    real_refs = refs[n:2 * n]
    out_ref = refs[2 * n]

    lane_iota = jax.lax.broadcasted_iota(jnp.int32, (1, 128), 1)  # hoisted
    row_iotas = {}
    total = jnp.float32(0.0)
    for j, (s_pad, rows_per_batch) in enumerate(metas):
        rows = batch * rows_per_batch
        if rows not in row_iotas:
            row_iotas[rows] = jax.lax.broadcasted_iota(jnp.int32, (rows, 1), 0)
        row_iota = row_iotas[rows]

        # Explicit f32 upcast before the subtraction (v5e has no bf16 VPU path).
        d = jnp.abs(fake_refs[j][...].astype(jnp.float32)
                    - real_refs[j][...].astype(jnp.float32))
        layer_sum = _masked_sum(d, len_ref, j * batch, batch, s_pad,
                                rows_per_batch, lane_iota, row_iota)
        num = len_ref[j * batch]
        for b in range(1, batch):
            num = num + len_ref[j * batch + b]
        # Unclamped division matches the PyTorch module (inf/nan if num == 0).
        total = total + layer_sum / num.astype(jnp.float32)

    out_ref[...] = jnp.full(out_ref.shape, wt * total, jnp.float32)


def feature_loss(real, fake, mask_ratio, n_blocks=3, n_features=16, n_layers=4):
    """real/fake: list (n_blocks) of lists (n_layers+1) of (B, C_j, S_j) arrays."""
    wt = (1.0 / n_blocks) * (4.0 / (n_layers + 1))

    fake_rows, real_rows, metas, s_orig = [], [], [], []
    for i in range(n_blocks):
        for j in range(len(fake[i]) - 1):          # last entry (disc. output) excluded
            f = fake[i][j]
            r = jax.lax.stop_gradient(real[i][j])  # .detach()
            fx, s_pad, rpb = _lane_dense_rows(f)
            rx, _, _ = _lane_dense_rows(r)
            fake_rows.append(fx)
            real_rows.append(rx)
            metas.append((s_pad, rpb))
            s_orig.append(f.shape[2])

    L = len(metas)
    B = fake[0][0].shape[0]

    # Per-layer, per-batch valid lengths -> flat int32 array for scalar prefetch.
    lengths = jnp.concatenate(
        [jnp.floor(mask_ratio * s).astype(jnp.int32) for s in s_orig])   # (L*B,)

    grid_spec = pltpu.PrefetchScalarGridSpec(
        num_scalar_prefetch=1,
        grid=(1,),                                   # single step: no per-step overhead
        in_specs=[pl.BlockSpec(x.shape, lambda i, _l: (0, 0))
                  for x in (fake_rows + real_rows)],
        out_specs=pl.BlockSpec((1, 128), lambda i, _l: (0, 0)),
    )
    out = pl.pallas_call(
        functools.partial(_feature_loss_kernel, metas=tuple(metas),
                          batch=B, wt=float(wt)),
        out_shape=jax.ShapeDtypeStruct((1, 128), jnp.float32),
        grid_spec=grid_spec,
    )(lengths, *fake_rows, *real_rows)
    return out[0, 0]


# ---------------------------------------------------------------------------
# Standalone masked_mean_from_ratios (single-step, one-input kernel).
# ---------------------------------------------------------------------------
def _masked_mean_kernel(len_ref, x_ref, out_ref, *, s_pad, rows_per_batch, batch):
    rows = batch * rows_per_batch
    lane_iota = jax.lax.broadcasted_iota(jnp.int32, (1, 128), 1)
    row_iota = jax.lax.broadcasted_iota(jnp.int32, (rows, 1), 0)
    x = x_ref[...].astype(jnp.float32)
    s = _masked_sum(x, len_ref, 0, batch, s_pad, rows_per_batch,
                    lane_iota, row_iota)
    num = len_ref[0]
    for b in range(1, batch):
        num = num + len_ref[b]
    out_ref[...] = jnp.full(out_ref.shape, s / num.astype(jnp.float32), jnp.float32)


def masked_mean_from_ratios(tensor, mask_ratio):
    assert tensor.ndim == 3
    assert mask_ratio.ndim == 1
    assert mask_ratio.shape[0] == tensor.shape[0]
    B, _, S = tensor.shape
    x, s_pad, rpb = _lane_dense_rows(tensor)
    lengths = jnp.floor(mask_ratio * S).astype(jnp.int32)        # (B,)

    grid_spec = pltpu.PrefetchScalarGridSpec(
        num_scalar_prefetch=1,
        grid=(1,),
        in_specs=[pl.BlockSpec(x.shape, lambda i, _l: (0, 0))],
        out_specs=pl.BlockSpec((1, 128), lambda i, _l: (0, 0)),
    )
    out = pl.pallas_call(
        functools.partial(_masked_mean_kernel, s_pad=s_pad,
                          rows_per_batch=rpb, batch=B),
        out_shape=jax.ShapeDtypeStruct((1, 128), jnp.float32),
        grid_spec=grid_spec,
    )(lengths, x)
    # NOTE: matches PyTorch exactly (no clamp) -> inf/nan if no valid samples.
    return out[0, 0]


# ---------------------------------------------------------------------------
# Pure-JAX reference for correctness checking.
# ---------------------------------------------------------------------------
def _reference_feature_loss(real, fake, mask_ratio, n_blocks=3, n_layers=4):
    wt = (1.0 / n_blocks) * (4.0 / (n_layers + 1))
    loss = jnp.float32(0.0)
    for i in range(n_blocks):
        for j in range(len(fake[i]) - 1):
            t = jnp.abs(fake[i][j] - real[i][j])
            _, _, S = t.shape
            lengths = jnp.floor(mask_ratio * S).astype(jnp.int32)
            num = lengths.sum()
            mask = (jnp.arange(S)[None, None, :] < lengths[:, None, None])
            loss = loss + wt * jnp.where(mask, t, 0.0).sum() / num.astype(jnp.float32)
    return loss


if __name__ == "__main__":
    key = jax.random.PRNGKey(0)

    n_blocks, n_features, n_layers = 3, 16, 4
    B = 2
    # Per-layer discriminator feature-map shapes: (B, C_j, S_j)
    layer_shapes = [
        (B, n_features * (2 ** j), 64 // (2 ** j)) for j in range(n_layers)
    ]
    # Final element of each block is the discriminator output (unused by the loss).
    final_shape = (B, 1, layer_shapes[-1][-1])

    real, fake = [], []
    for i in range(n_blocks):
        r_block, f_block = [], []
        for shp in layer_shapes + [final_shape]:
            key, k1, k2 = jax.random.split(key, 3)
            r_block.append(jax.random.normal(k1, shp, dtype=jnp.float32))
            f_block.append(jax.random.normal(k2, shp, dtype=jnp.float32))
        real.append(r_block)
        fake.append(f_block)

    key, km = jax.random.split(key)
    mask_ratio = jax.random.uniform(km, (B,), dtype=jnp.float32,
                                    minval=0.3, maxval=1.0)

    loss_fn = jax.jit(functools.partial(feature_loss, n_blocks=n_blocks,
                                        n_features=n_features,
                                        n_layers=n_layers))
    loss = jax.block_until_ready(loss_fn(real, fake, mask_ratio))

    ref = jax.block_until_ready(
        _reference_feature_loss(real, fake, mask_ratio,
                                n_blocks=n_blocks, n_layers=n_layers))
    assert jnp.allclose(loss, ref, rtol=1e-5, atol=1e-5), (loss, ref)

    # Also exercise the standalone masked_mean_from_ratios kernel.
    t0 = jnp.abs(fake[0][0] - real[0][0])
    mm = jax.block_until_ready(masked_mean_from_ratios(t0, mask_ratio))
    _, _, S0 = t0.shape
    lens0 = jnp.floor(mask_ratio * S0).astype(jnp.int32)
    mask0 = jnp.arange(S0)[None, None, :] < lens0[:, None, None]
    mm_ref = jnp.where(mask0, t0, 0.0).sum() / lens0.sum().astype(jnp.float32)
    assert jnp.allclose(mm, mm_ref, rtol=1e-5, atol=1e-5), (mm, mm_ref)

    print("KERNEL_OK")
</pallas_src>

<mosaic_0001>
module attributes {stable_mosaic.version = 11 : i64} {
  func.func @_feature_loss_kernel(%arg0: i32, %arg1: memref<24xi32, #tpu.memory_space<smem>>, %arg2: memref<16x128xf32, #tpu.memory_space<vmem>>, %arg3: memref<16x128xf32, #tpu.memory_space<vmem>>, %arg4: memref<16x128xf32, #tpu.memory_space<vmem>>, %arg5: memref<16x128xf32, #tpu.memory_space<vmem>>, %arg6: memref<16x128xf32, #tpu.memory_space<vmem>>, %arg7: memref<16x128xf32, #tpu.memory_space<vmem>>, %arg8: memref<16x128xf32, #tpu.memory_space<vmem>>, %arg9: memref<16x128xf32, #tpu.memory_space<vmem>>, %arg10: memref<16x128xf32, #tpu.memory_space<vmem>>, %arg11: memref<16x128xf32, #tpu.memory_space<vmem>>, %arg12: memref<16x128xf32, #tpu.memory_space<vmem>>, %arg13: memref<16x128xf32, #tpu.memory_space<vmem>>, %arg14: memref<16x128xf32, #tpu.memory_space<vmem>>, %arg15: memref<16x128xf32, #tpu.memory_space<vmem>>, %arg16: memref<16x128xf32, #tpu.memory_space<vmem>>, %arg17: memref<16x128xf32, #tpu.memory_space<vmem>>, %arg18: memref<16x128xf32, #tpu.memory_space<vmem>>, %arg19: memref<16x128xf32, #tpu.memory_space<vmem>>, %arg20: memref<16x128xf32, #tpu.memory_space<vmem>>, %arg21: memref<16x128xf32, #tpu.memory_space<vmem>>, %arg22: memref<16x128xf32, #tpu.memory_space<vmem>>, %arg23: memref<16x128xf32, #tpu.memory_space<vmem>>, %arg24: memref<16x128xf32, #tpu.memory_space<vmem>>, %arg25: memref<16x128xf32, #tpu.memory_space<vmem>>, %arg26: memref<1x128xf32, #tpu.memory_space<vmem>>) attributes {dimension_semantics = [#tpu.dimension_semantics<arbitrary>], iteration_bounds = array<i64: 1>, scalar_prefetch = 1 : i64, scratch_operands = 0 : i64, tpu.core_type = #tpu.core_type<tc>, window_params = [{pipeline_mode = #tpu.pipeline_mode<synchronous>, transform_indices = @transform_0, window_bounds = array<i64: 16, 128>}, {pipeline_mode = #tpu.pipeline_mode<synchronous>, transform_indices = @transform_1, window_bounds = array<i64: 16, 128>}, {pipeline_mode = #tpu.pipeline_mode<synchronous>, transform_indices = @transform_2, window_bounds = array<i64: 16, 128>}, {pipeline_mode = #tpu.pipeline_mode<synchronous>, transform_indices = @transform_3, window_bounds = array<i64: 16, 128>}, {pipeline_mode = #tpu.pipeline_mode<synchronous>, transform_indices = @transform_4, window_bounds = array<i64: 16, 128>}, {pipeline_mode = #tpu.pipeline_mode<synchronous>, transform_indices = @transform_5, window_bounds = array<i64: 16, 128>}, {pipeline_mode = #tpu.pipeline_mode<synchronous>, transform_indices = @transform_6, window_bounds = array<i64: 16, 128>}, {pipeline_mode = #tpu.pipeline_mode<synchronous>, transform_indices = @transform_7, window_bounds = array<i64: 16, 128>}, {pipeline_mode = #tpu.pipeline_mode<synchronous>, transform_indices = @transform_8, window_bounds = array<i64: 16, 128>}, {pipeline_mode = #tpu.pipeline_mode<synchronous>, transform_indices = @transform_9, window_bounds = array<i64: 16, 128>}, {pipeline_mode = #tpu.pipeline_mode<synchronous>, transform_indices = @transform_10, window_bounds = array<i64: 16, 128>}, {pipeline_mode = #tpu.pipeline_mode<synchronous>, transform_indices = @transform_11, window_bounds = array<i64: 16, 128>}, {pipeline_mode = #tpu.pipeline_mode<synchronous>, transform_indices = @transform_12, window_bounds = array<i64: 16, 128>}, {pipeline_mode = #tpu.pipeline_mode<synchronous>, transform_indices = @transform_13, window_bounds = array<i64: 16, 128>}, {pipeline_mode = #tpu.pipeline_mode<synchronous>, transform_indices = @transform_14, window_bounds = array<i64: 16, 128>}, {pipeline_mode = #tpu.pipeline_mode<synchronous>, transform_indices = @transform_15, window_bounds = array<i64: 16, 128>}, {pipeline_mode = #tpu.pipeline_mode<synchronous>, transform_indices = @transform_16, window_bounds = array<i64: 16, 128>}, {pipeline_mode = #tpu.pipeline_mode<synchronous>, transform_indices = @transform_17, window_bounds = array<i64: 16, 128>}, {pipeline_mode = #tpu.pipeline_mode<synchronous>, transform_indices = @transform_18, window_bounds = array<i64: 16, 128>}, {pipeline_mode = #tpu.pipeline_mode<synchronous>, transform_indices = @transform_19, window_bounds = array<i64: 16, 128>}, {pipeline_mode = #tpu.pipeline_mode<synchronous>, transform_indices = @transform_20, window_bounds = array<i64: 16, 128>}, {pipeline_mode = #tpu.pipeline_mode<synchronous>, transform_indices = @transform_21, window_bounds = array<i64: 16, 128>}, {pipeline_mode = #tpu.pipeline_mode<synchronous>, transform_indices = @transform_22, window_bounds = array<i64: 16, 128>}, {pipeline_mode = #tpu.pipeline_mode<synchronous>, transform_indices = @transform_23, window_bounds = array<i64: 16, 128>}, {pipeline_mode = #tpu.pipeline_mode<synchronous>, transform_indices = @transform_24, window_bounds = array<i64: 1, 128>}]} {
    %0 = tpu.iota {dimensions = array<i32: 1>} : vector<1x128xi32>
    %1 = tpu.iota {dimensions = array<i32: 0>} : vector<16x1xi32>
    %c0 = arith.constant 0 : index
    %c0_0 = arith.constant 0 : index
    %2 = vector.load %arg2[%c0, %c0_0] : memref<16x128xf32, #tpu.memory_space<vmem>>, vector<16x128xf32>
    %c0_1 = arith.constant 0 : index
    %c0_2 = arith.constant 0 : index
    %3 = vector.load %arg14[%c0_1, %c0_2] : memref<16x128xf32, #tpu.memory_space<vmem>>, vector<16x128xf32>
    %4 = arith.subf %2, %3 : vector<16x128xf32>
    %5 = math.absf %4 : vector<16x128xf32>
    %c63_i32 = arith.constant 63 : i32
    %6 = vector.broadcast %c63_i32 : i32 to vector<1x128xi32>
    %7 = arith.andi %0, %6 : vector<1x128xi32>
    %c0_3 = arith.constant 0 : index
    %8 = memref.load %arg1[%c0_3] : memref<24xi32, #tpu.memory_space<smem>>
    %9 = vector.broadcast %8 : i32 to vector<16x1xi32>
    %c8_i32 = arith.constant 8 : i32
    %10 = vector.broadcast %c8_i32 : i32 to vector<16x1xi32>
    %11 = arith.cmpi sge, %1, %10 : vector<16x1xi32>
    %c1 = arith.constant 1 : index
    %12 = memref.load %arg1[%c1] : memref<24xi32, #tpu.memory_space<smem>>
    %13 = vector.broadcast %12 : i32 to vector<16x1xi32>
    %14 = arith.select %11, %13, %9 : vector<16x1xi1>, vector<16x1xi32>
    %15 = vector.broadcast %7 : vector<1x128xi32> to vector<16x128xi32>
    %16 = vector.broadcast %14 : vector<16x1xi32> to vector<16x128xi32>
    %17 = arith.cmpi slt, %15, %16 : vector<16x128xi32>
    %cst = arith.constant 0.000000e+00 : f32
    %18 = vector.broadcast %cst : f32 to vector<16x128xf32>
    %19 = arith.select %17, %5, %18 : vector<16x128xi1>, vector<16x128xf32>
    %20 = vector.shape_cast %19 : vector<16x128xf32> to vector<1x16x128xf32>
    %cst_4 = arith.constant dense<0.000000e+00> : vector<1xf32>
    %21 = vector.multi_reduction <add>, %20, %cst_4 [1, 2] : vector<1x16x128xf32> to vector<1xf32>
    %22 = vector.shape_cast %21 : vector<1xf32> to vector<1x1x1xf32>
    %23 = vector.extract %22[0, 0, 0] : f32 from vector<1x1x1xf32>
    %c0_5 = arith.constant 0 : index
    %24 = memref.load %arg1[%c0_5] : memref<24xi32, #tpu.memory_space<smem>>
    %c1_6 = arith.constant 1 : index
    %25 = memref.load %arg1[%c1_6] : memref<24xi32, #tpu.memory_space<smem>>
    %26 = arith.addi %24, %25 : i32
    %27 = arith.sitofp %26 : i32 to f32
    %28 = arith.divf %23, %27 : f32
    %cst_7 = arith.constant 0.000000e+00 : f32
    %29 = arith.addf %cst_7, %28 : f32
    %c0_8 = arith.constant 0 : index
    %c0_9 = arith.constant 0 : index
    %30 = vector.load %arg3[%c0_8, %c0_9] : memref<16x128xf32, #tpu.memory_space<vmem>>, vector<16x128xf32>
    %c0_10 = arith.constant 0 : index
    %c0_11 = arith.constant 0 : index
    %31 = vector.load %arg15[%c0_10, %c0_11] : memref<16x128xf32, #tpu.memory_space<vmem>>, vector<16x128xf32>
    %32 = arith.subf %30, %31 : vector<16x128xf32>
    %33 = math.absf %32 : vector<16x128xf32>
    %c31_i32 = arith.constant 31 : i32
    %34 = vector.broadcast %c31_i32 : i32 to vector<1x128xi32>
    %35 = arith.andi %0, %34 : vector<1x128xi32>
    %c2 = arith.constant 2 : index
    %36 = memref.load %arg1[%c2] : memref<24xi32, #tpu.memory_space<smem>>
    %37 = vector.broadcast %36 : i32 to vector<16x1xi32>
    %c8_i32_12 = arith.constant 8 : i32
    %38 = vector.broadcast %c8_i32_12 : i32 to vector<16x1xi32>
    %39 = arith.cmpi sge, %1, %38 : vector<16x1xi32>
    %c3 = arith.constant 3 : index
    %40 = memref.load %arg1[%c3] : memref<24xi32, #tpu.memory_space<smem>>
    %41 = vector.broadcast %40 : i32 to vector<16x1xi32>
    %42 = arith.select %39, %41, %37 : vector<16x1xi1>, vector<16x1xi32>
    %43 = vector.broadcast %35 : vector<1x128xi32> to vector<16x128xi32>
    %44 = vector.broadcast %42 : vector<16x1xi32> to vector<16x128xi32>
    %45 = arith.cmpi slt, %43, %44 : vector<16x128xi32>
    %cst_13 = arith.constant 0.000000e+00 : f32
    %46 = vector.broadcast %cst_13 : f32 to vector<16x128xf32>
    %47 = arith.select %45, %33, %46 : vector<16x128xi1>, vector<16x128xf32>
    %48 = vector.shape_cast %47 : vector<16x128xf32> to vector<1x16x128xf32>
    %cst_14 = arith.constant dense<0.000000e+00> : vector<1xf32>
    %49 = vector.multi_reduction <add>, %48, %cst_14 [1, 2] : vector<1x16x128xf32> to vector<1xf32>
    %50 = vector.shape_cast %49 : vector<1xf32> to vector<1x1x1xf32>
    %51 = vector.extract %50[0, 0, 0] : f32 from vector<1x1x1xf32>
    %c2_15 = arith.constant 2 : index
    %52 = memref.load %arg1[%c2_15] : memref<24xi32, #tpu.memory_space<smem>>
    %c3_16 = arith.constant 3 : index
    %53 = memref.load %arg1[%c3_16] : memref<24xi32, #tpu.memory_space<smem>>
    %54 = arith.addi %52, %53 : i32
    %55 = arith.sitofp %54 : i32 to f32
    %56 = arith.divf %51, %55 : f32
    %57 = arith.addf %29, %56 : f32
    %c0_17 = arith.constant 0 : index
    %c0_18 = arith.constant 0 : index
    %58 = vector.load %arg4[%c0_17, %c0_18] : memref<16x128xf32, #tpu.memory_space<vmem>>, vector<16x128xf32>
    %c0_19 = arith.constant 0 : index
    %c0_20 = arith.constant 0 : index
    %59 = vector.load %arg16[%c0_19, %c0_20] : memref<16x128xf32, #tpu.memory_space<vmem>>, vector<16x128xf32>
    %60 = arith.subf %58, %59 : vector<16x128xf32>
    %61 = math.absf %60 : vector<16x128xf32>
    %c15_i32 = arith.constant 15 : i32
    %62 = vector.broadcast %c15_i32 : i32 to vector<1x128xi32>
    %63 = arith.andi %0, %62 : vector<1x128xi32>
    %c4 = arith.constant 4 : index
    %64 = memref.load %arg1[%c4] : memref<24xi32, #tpu.memory_space<smem>>
    %65 = vector.broadcast %64 : i32 to vector<16x1xi32>
    %c8_i32_21 = arith.constant 8 : i32
    %66 = vector.broadcast %c8_i32_21 : i32 to vector<16x1xi32>
    %67 = arith.cmpi sge, %1, %66 : vector<16x1xi32>
    %c5 = arith.constant 5 : index
    %68 = memref.load %arg1[%c5] : memref<24xi32, #tpu.memory_space<smem>>
    %69 = vector.broadcast %68 : i32 to vector<16x1xi32>
    %70 = arith.select %67, %69, %65 : vector<16x1xi1>, vector<16x1xi32>
    %71 = vector.broadcast %63 : vector<1x128xi32> to vector<16x128xi32>
    %72 = vector.broadcast %70 : vector<16x1xi32> to vector<16x128xi32>
    %73 = arith.cmpi slt, %71, %72 : vector<16x128xi32>
    %cst_22 = arith.constant 0.000000e+00 : f32
    %74 = vector.broadcast %cst_22 : f32 to vector<16x128xf32>
    %75 = arith.select %73, %61, %74 : vector<16x128xi1>, vector<16x128xf32>
    %76 = vector.shape_cast %75 : vector<16x128xf32> to vector<1x16x128xf32>
    %cst_23 = arith.constant dense<0.000000e+00> : vector<1xf32>
    %77 = vector.multi_reduction <add>, %76, %cst_23 [1, 2] : vector<1x16x128xf32> to vector<1xf32>
    %78 = vector.shape_cast %77 : vector<1xf32> to vector<1x1x1xf32>
    %79 = vector.extract %78[0, 0, 0] : f32 from vector<1x1x1xf32>
    %c4_24 = arith.constant 4 : index
    %80 = memref.load %arg1[%c4_24] : memref<24xi32, #tpu.memory_space<smem>>
    %c5_25 = arith.constant 5 : index
    %81 = memref.load %arg1[%c5_25] : memref<24xi32, #tpu.memory_space<smem>>
    %82 = arith.addi %80, %81 : i32
    %83 = arith.sitofp %82 : i32 to f32
    %84 = arith.divf %79, %83 : f32
    %85 = arith.addf %57, %84 : f32
    %c0_26 = arith.constant 0 : index
    %c0_27 = arith.constant 0 : index
    %86 = vector.load %arg5[%c0_26, %c0_27] : memref<16x128xf32, #tpu.memory_space<vmem>>, vector<16x128xf32>
    %c0_28 = arith.constant 0 : index
    %c0_29 = arith.constant 0 : index
    %87 = vector.load %arg17[%c0_28, %c0_29] : memref<16x128xf32, #tpu.memory_space<vmem>>, vector<16x128xf32>
    %88 = arith.subf %86, %87 : vector<16x128xf32>
    %89 = math.absf %88 : vector<16x128xf32>
    %c7_i32 = arith.constant 7 : i32
    %90 = vector.broadcast %c7_i32 : i32 to vector<1x128xi32>
    %91 = arith.andi %0, %90 : vector<1x128xi32>
    %c6 = arith.constant 6 : index
    %92 = memref.load %arg1[%c6] : memref<24xi32, #tpu.memory_space<smem>>
    %93 = vector.broadcast %92 : i32 to vector<16x1xi32>
    %c8_i32_30 = arith.constant 8 : i32
    %94 = vector.broadcast %c8_i32_30 : i32 to vector<16x1xi32>
    %95 = arith.cmpi sge, %1, %94 : vector<16x1xi32>
    %c7 = arith.constant 7 : index
    %96 = memref.load %arg1[%c7] : memref<24xi32, #tpu.memory_space<smem>>
    %97 = vector.broadcast %96 : i32 to vector<16x1xi32>
    %98 = arith.select %95, %97, %93 : vector<16x1xi1>, vector<16x1xi32>
    %99 = vector.broadcast %91 : vector<1x128xi32> to vector<16x128xi32>
    %100 = vector.broadcast %98 : vector<16x1xi32> to vector<16x128xi32>
    %101 = arith.cmpi slt, %99, %100 : vector<16x128xi32>
    %cst_31 = arith.constant 0.000000e+00 : f32
    %102 = vector.broadcast %cst_31 : f32 to vector<16x128xf32>
    %103 = arith.select %101, %89, %102 : vector<16x128xi1>, vector<16x128xf32>
    %104 = vector.shape_cast %103 : vector<16x128xf32> to vector<1x16x128xf32>
    %cst_32 = arith.constant dense<0.000000e+00> : vector<1xf32>
    %105 = vector.multi_reduction <add>, %104, %cst_32 [1, 2] : vector<1x16x128xf32> to vector<1xf32>
    %106 = vector.shape_cast %105 : vector<1xf32> to vector<1x1x1xf32>
    %107 = vector.extract %106[0, 0, 0] : f32 from vector<1x1x1xf32>
    %c6_33 = arith.constant 6 : index
    %108 = memref.load %arg1[%c6_33] : memref<24xi32, #tpu.memory_space<smem>>
    %c7_34 = arith.constant 7 : index
    %109 = memref.load %arg1[%c7_34] : memref<24xi32, #tpu.memory_space<smem>>
    %110 = arith.addi %108, %109 : i32
    %111 = arith.sitofp %110 : i32 to f32
    %112 = arith.divf %107, %111 : f32
    %113 = arith.addf %85, %112 : f32
    %c0_35 = arith.constant 0 : index
    %c0_36 = arith.constant 0 : index
    %114 = vector.load %arg6[%c0_35, %c0_36] : memref<16x128xf32, #tpu.memory_space<vmem>>, vector<16x128xf32>
    %c0_37 = arith.constant 0 : index
    %c0_38 = arith.constant 0 : index
    %115 = vector.load %arg18[%c0_37, %c0_38] : memref<16x128xf32, #tpu.memory_space<vmem>>, vector<16x128xf32>
    %116 = arith.subf %114, %115 : vector<16x128xf32>
    %117 = math.absf %116 : vector<16x128xf32>
    %c63_i32_39 = arith.constant 63 : i32
    %118 = vector.broadcast %c63_i32_39 : i32 to vector<1x128xi32>
    %119 = arith.andi %0, %118 : vector<1x128xi32>
    %c8 = arith.constant 8 : index
    %120 = memref.load %arg1[%c8] : memref<24xi32, #tpu.memory_space<smem>>
    %121 = vector.broadcast %120 : i32 to vector<16x1xi32>
    %c8_i32_40 = arith.constant 8 : i32
    %122 = vector.broadcast %c8_i32_40 : i32 to vector<16x1xi32>
    %123 = arith.cmpi sge, %1, %122 : vector<16x1xi32>
    %c9 = arith.constant 9 : index
    %124 = memref.load %arg1[%c9] : memref<24xi32, #tpu.memory_space<smem>>
    %125 = vector.broadcast %124 : i32 to vector<16x1xi32>
    %126 = arith.select %123, %125, %121 : vector<16x1xi1>, vector<16x1xi32>
    %127 = vector.broadcast %119 : vector<1x128xi32> to vector<16x128xi32>
    %128 = vector.broadcast %126 : vector<16x1xi32> to vector<16x128xi32>
    %129 = arith.cmpi slt, %127, %128 : vector<16x128xi32>
    %cst_41 = arith.constant 0.000000e+00 : f32
    %130 = vector.broadcast %cst_41 : f32 to vector<16x128xf32>
    %131 = arith.select %129, %117, %130 : vector<16x128xi1>, vector<16x128xf32>
    %132 = vector.shape_cast %131 : vector<16x128xf32> to vector<1x16x128xf32>
    %cst_42 = arith.constant dense<0.000000e+00> : vector<1xf32>
    %133 = vector.multi_reduction <add>, %132, %cst_42 [1, 2] : vector<1x16x128xf32> to vector<1xf32>
    %134 = vector.shape_cast %133 : vector<1xf32> to vector<1x1x1xf32>
    %135 = vector.extract %134[0, 0, 0] : f32 from vector<1x1x1xf32>
    %c8_43 = arith.constant 8 : index
    %136 = memref.load %arg1[%c8_43] : memref<24xi32, #tpu.memory_space<smem>>
    %c9_44 = arith.constant 9 : index
    %137 = memref.load %arg1[%c9_44] : memref<24xi32, #tpu.memory_space<smem>>
    %138 = arith.addi %136, %137 : i32
    %139 = arith.sitofp %138 : i32 to f32
    %140 = arith.divf %135, %139 : f32
    %141 = arith.addf %113, %140 : f32
    %c0_45 = arith.constant 0 : index
    %c0_46 = arith.constant 0 : index
    %142 = vector.load %arg7[%c0_45, %c0_46] : memref<16x128xf32, #tpu.memory_space<vmem>>, vector<16x128xf32>
    %c0_47 = arith.constant 0 : index
    %c0_48 = arith.constant 0 : index
    %143 = vector.load %arg19[%c0_47, %c0_48] : memref<16x128xf32, #tpu.memory_space<vmem>>, vector<16x128xf32>
    %144 = arith.subf %142, %143 : vector<16x128xf32>
    %145 = math.absf %144 : vector<16x128xf32>
    %c31_i32_49 = arith.constant 31 : i32
    %146 = vector.broadcast %c31_i32_49 : i32 to vector<1x128xi32>
    %147 = arith.andi %0, %146 : vector<1x128xi32>
    %c10 = arith.constant 10 : index
    %148 = memref.load %arg1[%c10] : memref<24xi32, #tpu.memory_space<smem>>
    %149 = vector.broadcast %148 : i32 to vector<16x1xi32>
    %c8_i32_50 = arith.constant 8 : i32
    %150 = vector.broadcast %c8_i32_50 : i32 to vector<16x1xi32>
    %151 = arith.cmpi sge, %1, %150 : vector<16x1xi32>
    %c11 = arith.constant 11 : index
    %152 = memref.load %arg1[%c11] : memref<24xi32, #tpu.memory_space<smem>>
    %153 = vector.broadcast %152 : i32 to vector<16x1xi32>
    %154 = arith.select %151, %153, %149 : vector<16x1xi1>, vector<16x1xi32>
    %155 = vector.broadcast %147 : vector<1x128xi32> to vector<16x128xi32>
    %156 = vector.broadcast %154 : vector<16x1xi32> to vector<16x128xi32>
    %157 = arith.cmpi slt, %155, %156 : vector<16x128xi32>
    %cst_51 = arith.constant 0.000000e+00 : f32
    %158 = vector.broadcast %cst_51 : f32 to vector<16x128xf32>
    %159 = arith.select %157, %145, %158 : vector<16x128xi1>, vector<16x128xf32>
    %160 = vector.shape_cast %159 : vector<16x128xf32> to vector<1x16x128xf32>
    %cst_52 = arith.constant dense<0.000000e+00> : vector<1xf32>
    %161 = vector.multi_reduction <add>, %160, %cst_52 [1, 2] : vector<1x16x128xf32> to vector<1xf32>
    %162 = vector.shape_cast %161 : vector<1xf32> to vector<1x1x1xf32>
    %163 = vector.extract %162[0, 0, 0] : f32 from vector<1x1x1xf32>
    %c10_53 = arith.constant 10 : index
    %164 = memref.load %arg1[%c10_53] : memref<24xi32, #tpu.memory_space<smem>>
    %c11_54 = arith.constant 11 : index
    %165 = memref.load %arg1[%c11_54] : memref<24xi32, #tpu.memory_space<smem>>
    %166 = arith.addi %164, %165 : i32
    %167 = arith.sitofp %166 : i32 to f32
    %168 = arith.divf %163, %167 : f32
    %169 = arith.addf %141, %168 : f32
    %c0_55 = arith.constant 0 : index
    %c0_56 = arith.constant 0 : index
    %170 = vector.load %arg8[%c0_55, %c0_56] : memref<16x128xf32, #tpu.memory_space<vmem>>, vector<16x128xf32>
    %c0_57 = arith.constant 0 : index
    %c0_58 = arith.constant 0 : index
    %171 = vector.load %arg20[%c0_57, %c0_58] : memref<16x128xf32, #tpu.memory_space<vmem>>, vector<16x128xf32>
    %172 = arith.subf %170, %171 : vector<16x128xf32>
    %173 = math.absf %172 : vector<16x128xf32>
    %c15_i32_59 = arith.constant 15 : i32
    %174 = vector.broadcast %c15_i32_59 : i32 to vector<1x128xi32>
    %175 = arith.andi %0, %174 : vector<1x128xi32>
    %c12 = arith.constant 12 : index
    %176 = memref.load %arg1[%c12] : memref<24xi32, #tpu.memory_space<smem>>
    %177 = vector.broadcast %176 : i32 to vector<16x1xi32>
    %c8_i32_60 = arith.constant 8 : i32
    %178 = vector.broadcast %c8_i32_60 : i32 to vector<16x1xi32>
    %179 = arith.cmpi sge, %1, %178 : vector<16x1xi32>
    %c13 = arith.constant 13 : index
    %180 = memref.load %arg1[%c13] : memref<24xi32, #tpu.memory_space<smem>>
    %181 = vector.broadcast %180 : i32 to vector<16x1xi32>
    %182 = arith.select %179, %181, %177 : vector<16x1xi1>, vector<16x1xi32>
    %183 = vector.broadcast %175 : vector<1x128xi32> to vector<16x128xi32>
    %184 = vector.broadcast %182 : vector<16x1xi32> to vector<16x128xi32>
    %185 = arith.cmpi slt, %183, %184 : vector<16x128xi32>
    %cst_61 = arith.constant 0.000000e+00 : f32
    %186 = vector.broadcast %cst_61 : f32 to vector<16x128xf32>
    %187 = arith.select %185, %173, %186 : vector<16x128xi1>, vector<16x128xf32>
    %188 = vector.shape_cast %187 : vector<16x128xf32> to vector<1x16x128xf32>
    %cst_62 = arith.constant dense<0.000000e+00> : vector<1xf32>
    %189 = vector.multi_reduction <add>, %188, %cst_62 [1, 2] : vector<1x16x128xf32> to vector<1xf32>
    %190 = vector.shape_cast %189 : vector<1xf32> to vector<1x1x1xf32>
    %191 = vector.extract %190[0, 0, 0] : f32 from vector<1x1x1xf32>
    %c12_63 = arith.constant 12 : index
    %192 = memref.load %arg1[%c12_63] : memref<24xi32, #tpu.memory_space<smem>>
    %c13_64 = arith.constant 13 : index
    %193 = memref.load %arg1[%c13_64] : memref<24xi32, #tpu.memory_space<smem>>
    %194 = arith.addi %192, %193 : i32
    %195 = arith.sitofp %194 : i32 to f32
    %196 = arith.divf %191, %195 : f32
    %197 = arith.addf %169, %196 : f32
    %c0_65 = arith.constant 0 : index
    %c0_66 = arith.constant 0 : index
    %198 = vector.load %arg9[%c0_65, %c0_66] : memref<16x128xf32, #tpu.memory_space<vmem>>, vector<16x128xf32>
    %c0_67 = arith.constant 0 : index
    %c0_68 = arith.constant 0 : index
    %199 = vector.load %arg21[%c0_67, %c0_68] : memref<16x128xf32, #tpu.memory_space<vmem>>, vector<16x128xf32>
    %200 = arith.subf %198, %199 : vector<16x128xf32>
    %201 = math.absf %200 : vector<16x128xf32>
    %c7_i32_69 = arith.constant 7 : i32
    %202 = vector.broadcast %c7_i32_69 : i32 to vector<1x128xi32>
    %203 = arith.andi %0, %202 : vector<1x128xi32>
    %c14 = arith.constant 14 : index
    %204 = memref.load %arg1[%c14] : memref<24xi32, #tpu.memory_space<smem>>
    %205 = vector.broadcast %204 : i32 to vector<16x1xi32>
    %c8_i32_70 = arith.constant 8 : i32
    %206 = vector.broadcast %c8_i32_70 : i32 to vector<16x1xi32>
    %207 = arith.cmpi sge, %1, %206 : vector<16x1xi32>
    %c15 = arith.constant 15 : index
    %208 = memref.load %arg1[%c15] : memref<24xi32, #tpu.memory_space<smem>>
    %209 = vector.broadcast %208 : i32 to vector<16x1xi32>
    %210 = arith.select %207, %209, %205 : vector<16x1xi1>, vector<16x1xi32>
    %211 = vector.broadcast %203 : vector<1x128xi32> to vector<16x128xi32>
    %212 = vector.broadcast %210 : vector<16x1xi32> to vector<16x128xi32>
    %213 = arith.cmpi slt, %211, %212 : vector<16x128xi32>
    %cst_71 = arith.constant 0.000000e+00 : f32
    %214 = vector.broadcast %cst_71 : f32 to vector<16x128xf32>
    %215 = arith.select %213, %201, %214 : vector<16x128xi1>, vector<16x128xf32>
    %216 = vector.shape_cast %215 : vector<16x128xf32> to vector<1x16x128xf32>
    %cst_72 = arith.constant dense<0.000000e+00> : vector<1xf32>
    %217 = vector.multi_reduction <add>, %216, %cst_72 [1, 2] : vector<1x16x128xf32> to vector<1xf32>
    %218 = vector.shape_cast %217 : vector<1xf32> to vector<1x1x1xf32>
    %219 = vector.extract %218[0, 0, 0] : f32 from vector<1x1x1xf32>
    %c14_73 = arith.constant 14 : index
    %220 = memref.load %arg1[%c14_73] : memref<24xi32, #tpu.memory_space<smem>>
    %c15_74 = arith.constant 15 : index
    %221 = memref.load %arg1[%c15_74] : memref<24xi32, #tpu.memory_space<smem>>
    %222 = arith.addi %220, %221 : i32
    %223 = arith.sitofp %222 : i32 to f32
    %224 = arith.divf %219, %223 : f32
    %225 = arith.addf %197, %224 : f32
    %c0_75 = arith.constant 0 : index
    %c0_76 = arith.constant 0 : index
    %226 = vector.load %arg10[%c0_75, %c0_76] : memref<16x128xf32, #tpu.memory_space<vmem>>, vector<16x128xf32>
    %c0_77 = arith.constant 0 : index
    %c0_78 = arith.constant 0 : index
    %227 = vector.load %arg22[%c0_77, %c0_78] : memref<16x128xf32, #tpu.memory_space<vmem>>, vector<16x128xf32>
    %228 = arith.subf %226, %227 : vector<16x128xf32>
    %229 = math.absf %228 : vector<16x128xf32>
    %c63_i32_79 = arith.constant 63 : i32
    %230 = vector.broadcast %c63_i32_79 : i32 to vector<1x128xi32>
    %231 = arith.andi %0, %230 : vector<1x128xi32>
    %c16 = arith.constant 16 : index
    %232 = memref.load %arg1[%c16] : memref<24xi32, #tpu.memory_space<smem>>
    %233 = vector.broadcast %232 : i32 to vector<16x1xi32>
    %c8_i32_80 = arith.constant 8 : i32
    %234 = vector.broadcast %c8_i32_80 : i32 to vector<16x1xi32>
    %235 = arith.cmpi sge, %1, %234 : vector<16x1xi32>
    %c17 = arith.constant 17 : index
    %236 = memref.load %arg1[%c17] : memref<24xi32, #tpu.memory_space<smem>>
    %237 = vector.broadcast %236 : i32 to vector<16x1xi32>
    %238 = arith.select %235, %237, %233 : vector<16x1xi1>, vector<16x1xi32>
    %239 = vector.broadcast %231 : vector<1x128xi32> to vector<16x128xi32>
    %240 = vector.broadcast %238 : vector<16x1xi32> to vector<16x128xi32>
    %241 = arith.cmpi slt, %239, %240 : vector<16x128xi32>
    %cst_81 = arith.constant 0.000000e+00 : f32
    %242 = vector.broadcast %cst_81 : f32 to vector<16x128xf32>
    %243 = arith.select %241, %229, %242 : vector<16x128xi1>, vector<16x128xf32>
    %244 = vector.shape_cast %243 : vector<16x128xf32> to vector<1x16x128xf32>
    %cst_82 = arith.constant dense<0.000000e+00> : vector<1xf32>
    %245 = vector.multi_reduction <add>, %244, %cst_82 [1, 2] : vector<1x16x128xf32> to vector<1xf32>
    %246 = vector.shape_cast %245 : vector<1xf32> to vector<1x1x1xf32>
    %247 = vector.extract %246[0, 0, 0] : f32 from vector<1x1x1xf32>
    %c16_83 = arith.constant 16 : index
    %248 = memref.load %arg1[%c16_83] : memref<24xi32, #tpu.memory_space<smem>>
    %c17_84 = arith.constant 17 : index
    %249 = memref.load %arg1[%c17_84] : memref<24xi32, #tpu.memory_space<smem>>
    %250 = arith.addi %248, %249 : i32
    %251 = arith.sitofp %250 : i32 to f32
    %252 = arith.divf %247, %251 : f32
    %253 = arith.addf %225, %252 : f32
    %c0_85 = arith.constant 0 : index
    %c0_86 = arith.constant 0 : index
    %254 = vector.load %arg11[%c0_85, %c0_86] : memref<16x128xf32, #tpu.memory_space<vmem>>, vector<16x128xf32>
    %c0_87 = arith.constant 0 : index
    %c0_88 = arith.constant 0 : index
    %255 = vector.load %arg23[%c0_87, %c0_88] : memref<16x128xf32, #tpu.memory_space<vmem>>, vector<16x128xf32>
    %256 = arith.subf %254, %255 : vector<16x128xf32>
    %257 = math.absf %256 : vector<16x128xf32>
    %c31_i32_89 = arith.constant 31 : i32
    %258 = vector.broadcast %c31_i32_89 : i32 to vector<1x128xi32>
    %259 = arith.andi %0, %258 : vector<1x128xi32>
    %c18 = arith.constant 18 : index
    %260 = memref.load %arg1[%c18] : memref<24xi32, #tpu.memory_space<smem>>
    %261 = vector.broadcast %260 : i32 to vector<16x1xi32>
    %c8_i32_90 = arith.constant 8 : i32
    %262 = vector.broadcast %c8_i32_90 : i32 to vector<16x1xi32>
    %263 = arith.cmpi sge, %1, %262 : vector<16x1xi32>
    %c19 = arith.constant 19 : index
    %264 = memref.load %arg1[%c19] : memref<24xi32, #tpu.memory_space<smem>>
    %265 = vector.broadcast %264 : i32 to vector<16x1xi32>
    %266 = arith.select %263, %265, %261 : vector<16x1xi1>, vector<16x1xi32>
    %267 = vector.broadcast %259 : vector<1x128xi32> to vector<16x128xi32>
    %268 = vector.broadcast %266 : vector<16x1xi32> to vector<16x128xi32>
    %269 = arith.cmpi slt, %267, %268 : vector<16x128xi32>
    %cst_91 = arith.constant 0.000000e+00 : f32
    %270 = vector.broadcast %cst_91 : f32 to vector<16x128xf32>
    %271 = arith.select %269, %257, %270 : vector<16x128xi1>, vector<16x128xf32>
    %272 = vector.shape_cast %271 : vector<16x128xf32> to vector<1x16x128xf32>
    %cst_92 = arith.constant dense<0.000000e+00> : vector<1xf32>
    %273 = vector.multi_reduction <add>, %272, %cst_92 [1, 2] : vector<1x16x128xf32> to vector<1xf32>
    %274 = vector.shape_cast %273 : vector<1xf32> to vector<1x1x1xf32>
    %275 = vector.extract %274[0, 0, 0] : f32 from vector<1x1x1xf32>
    %c18_93 = arith.constant 18 : index
    %276 = memref.load %arg1[%c18_93] : memref<24xi32, #tpu.memory_space<smem>>
    %c19_94 = arith.constant 19 : index
    %277 = memref.load %arg1[%c19_94] : memref<24xi32, #tpu.memory_space<smem>>
    %278 = arith.addi %276, %277 : i32
    %279 = arith.sitofp %278 : i32 to f32
    %280 = arith.divf %275, %279 : f32
    %281 = arith.addf %253, %280 : f32
    %c0_95 = arith.constant 0 : index
    %c0_96 = arith.constant 0 : index
    %282 = vector.load %arg12[%c0_95, %c0_96] : memref<16x128xf32, #tpu.memory_space<vmem>>, vector<16x128xf32>
    %c0_97 = arith.constant 0 : index
    %c0_98 = arith.constant 0 : index
    %283 = vector.load %arg24[%c0_97, %c0_98] : memref<16x128xf32, #tpu.memory_space<vmem>>, vector<16x128xf32>
    %284 = arith.subf %282, %283 : vector<16x128xf32>
    %285 = math.absf %284 : vector<16x128xf32>
    %c15_i32_99 = arith.constant 15 : i32
    %286 = vector.broadcast %c15_i32_99 : i32 to vector<1x128xi32>
    %287 = arith.andi %0, %286 : vector<1x128xi32>
    %c20 = arith.constant 20 : index
    %288 = memref.load %arg1[%c20] : memref<24xi32, #tpu.memory_space<smem>>
    %289 = vector.broadcast %288 : i32 to vector<16x1xi32>
    %c8_i32_100 = arith.constant 8 : i32
    %290 = vector.broadcast %c8_i32_100 : i32 to vector<16x1xi32>
    %291 = arith.cmpi sge, %1, %290 : vector<16x1xi32>
    %c21 = arith.constant 21 : index
    %292 = memref.load %arg1[%c21] : memref<24xi32, #tpu.memory_space<smem>>
    %293 = vector.broadcast %292 : i32 to vector<16x1xi32>
    %294 = arith.select %291, %293, %289 : vector<16x1xi1>, vector<16x1xi32>
    %295 = vector.broadcast %287 : vector<1x128xi32> to vector<16x128xi32>
    %296 = vector.broadcast %294 : vector<16x1xi32> to vector<16x128xi32>
    %297 = arith.cmpi slt, %295, %296 : vector<16x128xi32>
    %cst_101 = arith.constant 0.000000e+00 : f32
    %298 = vector.broadcast %cst_101 : f32 to vector<16x128xf32>
    %299 = arith.select %297, %285, %298 : vector<16x128xi1>, vector<16x128xf32>
    %300 = vector.shape_cast %299 : vector<16x128xf32> to vector<1x16x128xf32>
    %cst_102 = arith.constant dense<0.000000e+00> : vector<1xf32>
    %301 = vector.multi_reduction <add>, %300, %cst_102 [1, 2] : vector<1x16x128xf32> to vector<1xf32>
    %302 = vector.shape_cast %301 : vector<1xf32> to vector<1x1x1xf32>
    %303 = vector.extract %302[0, 0, 0] : f32 from vector<1x1x1xf32>
    %c20_103 = arith.constant 20 : index
    %304 = memref.load %arg1[%c20_103] : memref<24xi32, #tpu.memory_space<smem>>
    %c21_104 = arith.constant 21 : index
    %305 = memref.load %arg1[%c21_104] : memref<24xi32, #tpu.memory_space<smem>>
    %306 = arith.addi %304, %305 : i32
    %307 = arith.sitofp %306 : i32 to f32
    %308 = arith.divf %303, %307 : f32
    %309 = arith.addf %281, %308 : f32
    %c0_105 = arith.constant 0 : index
    %c0_106 = arith.constant 0 : index
    %310 = vector.load %arg13[%c0_105, %c0_106] : memref<16x128xf32, #tpu.memory_space<vmem>>, vector<16x128xf32>
    %c0_107 = arith.constant 0 : index
    %c0_108 = arith.constant 0 : index
    %311 = vector.load %arg25[%c0_107, %c0_108] : memref<16x128xf32, #tpu.memory_space<vmem>>, vector<16x128xf32>
    %312 = arith.subf %310, %311 : vector<16x128xf32>
    %313 = math.absf %312 : vector<16x128xf32>
    %c7_i32_109 = arith.constant 7 : i32
    %314 = vector.broadcast %c7_i32_109 : i32 to vector<1x128xi32>
    %315 = arith.andi %0, %314 : vector<1x128xi32>
    %c22 = arith.constant 22 : index
    %316 = memref.load %arg1[%c22] : memref<24xi32, #tpu.memory_space<smem>>
    %317 = vector.broadcast %316 : i32 to vector<16x1xi32>
    %c8_i32_110 = arith.constant 8 : i32
    %318 = vector.broadcast %c8_i32_110 : i32 to vector<16x1xi32>
    %319 = arith.cmpi sge, %1, %318 : vector<16x1xi32>
    %c23 = arith.constant 23 : index
    %320 = memref.load %arg1[%c23] : memref<24xi32, #tpu.memory_space<smem>>
    %321 = vector.broadcast %320 : i32 to vector<16x1xi32>
    %322 = arith.select %319, %321, %317 : vector<16x1xi1>, vector<16x1xi32>
    %323 = vector.broadcast %315 : vector<1x128xi32> to vector<16x128xi32>
    %324 = vector.broadcast %322 : vector<16x1xi32> to vector<16x128xi32>
    %325 = arith.cmpi slt, %323, %324 : vector<16x128xi32>
    %cst_111 = arith.constant 0.000000e+00 : f32
    %326 = vector.broadcast %cst_111 : f32 to vector<16x128xf32>
    %327 = arith.select %325, %313, %326 : vector<16x128xi1>, vector<16x128xf32>
    %328 = vector.shape_cast %327 : vector<16x128xf32> to vector<1x16x128xf32>
    %cst_112 = arith.constant dense<0.000000e+00> : vector<1xf32>
    %329 = vector.multi_reduction <add>, %328, %cst_112 [1, 2] : vector<1x16x128xf32> to vector<1xf32>
    %330 = vector.shape_cast %329 : vector<1xf32> to vector<1x1x1xf32>
    %331 = vector.extract %330[0, 0, 0] : f32 from vector<1x1x1xf32>
    %c22_113 = arith.constant 22 : index
    %332 = memref.load %arg1[%c22_113] : memref<24xi32, #tpu.memory_space<smem>>
    %c23_114 = arith.constant 23 : index
    %333 = memref.load %arg1[%c23_114] : memref<24xi32, #tpu.memory_space<smem>>
    %334 = arith.addi %332, %333 : i32
    %335 = arith.sitofp %334 : i32 to f32
    %336 = arith.divf %331, %335 : f32
    %337 = arith.addf %309, %336 : f32
    %cst_115 = arith.constant 0.266666681 : f32
    %338 = arith.mulf %cst_115, %337 : f32
    %339 = vector.broadcast %338 : f32 to vector<1x128xf32>
    %c0_116 = arith.constant 0 : index
    %c0_117 = arith.constant 0 : index
    %340 = vector.load %arg26[%c0_116, %c0_117] : memref<1x128xf32, #tpu.memory_space<vmem>>, vector<1x128xf32>
    tpu.vector_store %arg26[%c0_116, %c0_117], %339 {strides = array<i32>} : memref<1x128xf32, #tpu.memory_space<vmem>>, vector<1x128xf32>,
    return
  }
  func.func @transform_0(%arg0: i32, %arg1: memref<24xi32, #tpu.memory_space<smem>>) -> (i32, i32) {
    %c0_i32 = arith.constant 0 : i32
    %c0_i32_0 = arith.constant 0 : i32
    %c0_i32_1 = arith.constant 0 : i32
    return %c0_i32, %c0_i32_0 : i32, i32
  }
  func.func @transform_1(%arg0: i32, %arg1: memref<24xi32, #tpu.memory_space<smem>>) -> (i32, i32) {
    %c0_i32 = arith.constant 0 : i32
    %c0_i32_0 = arith.constant 0 : i32
    %c0_i32_1 = arith.constant 0 : i32
    return %c0_i32, %c0_i32_0 : i32, i32
  }
  func.func @transform_2(%arg0: i32, %arg1: memref<24xi32, #tpu.memory_space<smem>>) -> (i32, i32) {
    %c0_i32 = arith.constant 0 : i32
    %c0_i32_0 = arith.constant 0 : i32
    %c0_i32_1 = arith.constant 0 : i32
    return %c0_i32, %c0_i32_0 : i32, i32
  }
  func.func @transform_3(%arg0: i32, %arg1: memref<24xi32, #tpu.memory_space<smem>>) -> (i32, i32) {
    %c0_i32 = arith.constant 0 : i32
    %c0_i32_0 = arith.constant 0 : i32
    %c0_i32_1 = arith.constant 0 : i32
    return %c0_i32, %c0_i32_0 : i32, i32
  }
  func.func @transform_4(%arg0: i32, %arg1: memref<24xi32, #tpu.memory_space<smem>>) -> (i32, i32) {
    %c0_i32 = arith.constant 0 : i32
    %c0_i32_0 = arith.constant 0 : i32
    %c0_i32_1 = arith.constant 0 : i32
    return %c0_i32, %c0_i32_0 : i32, i32
  }
  func.func @transform_5(%arg0: i32, %arg1: memref<24xi32, #tpu.memory_space<smem>>) -> (i32, i32) {
    %c0_i32 = arith.constant 0 : i32
    %c0_i32_0 = arith.constant 0 : i32
    %c0_i32_1 = arith.constant 0 : i32
    return %c0_i32, %c0_i32_0 : i32, i32
  }
  func.func @transform_6(%arg0: i32, %arg1: memref<24xi32, #tpu.memory_space<smem>>) -> (i32, i32) {
    %c0_i32 = arith.constant 0 : i32
    %c0_i32_0 = arith.constant 0 : i32
    %c0_i32_1 = arith.constant 0 : i32
    return %c0_i32, %c0_i32_0 : i32, i32
  }
  func.func @transform_7(%arg0: i32, %arg1: memref<24xi32, #tpu.memory_space<smem>>) -> (i32, i32) {
    %c0_i32 = arith.constant 0 : i32
    %c0_i32_0 = arith.constant 0 : i32
    %c0_i32_1 = arith.constant 0 : i32
    return %c0_i32, %c0_i32_0 : i32, i32
  }
  func.func @transform_8(%arg0: i32, %arg1: memref<24xi32, #tpu.memory_space<smem>>) -> (i32, i32) {
    %c0_i32 = arith.constant 0 : i32
    %c0_i32_0 = arith.constant 0 : i32
    %c0_i32_1 = arith.constant 0 : i32
    return %c0_i32, %c0_i32_0 : i32, i32
  }
  func.func @transform_9(%arg0: i32, %arg1: memref<24xi32, #tpu.memory_space<smem>>) -> (i32, i32) {
    %c0_i32 = arith.constant 0 : i32
    %c0_i32_0 = arith.constant 0 : i32
    %c0_i32_1 = arith.constant 0 : i32
    return %c0_i32, %c0_i32_0 : i32, i32
  }
  func.func @transform_10(%arg0: i32, %arg1: memref<24xi32, #tpu.memory_space<smem>>) -> (i32, i32) {
    %c0_i32 = arith.constant 0 : i32
    %c0_i32_0 = arith.constant 0 : i32
    %c0_i32_1 = arith.constant 0 : i32
    return %c0_i32, %c0_i32_0 : i32, i32
  }
  func.func @transform_11(%arg0: i32, %arg1: memref<24xi32, #tpu.memory_space<smem>>) -> (i32, i32) {
    %c0_i32 = arith.constant 0 : i32
    %c0_i32_0 = arith.constant 0 : i32
    %c0_i32_1 = arith.constant 0 : i32
    return %c0_i32, %c0_i32_0 : i32, i32
  }
  func.func @transform_12(%arg0: i32, %arg1: memref<24xi32, #tpu.memory_space<smem>>) -> (i32, i32) {
    %c0_i32 = arith.constant 0 : i32
    %c0_i32_0 = arith.constant 0 : i32
    %c0_i32_1 = arith.constant 0 : i32
    return %c0_i32, %c0_i32_0 : i32, i32
  }
  func.func @transform_13(%arg0: i32, %arg1: memref<24xi32, #tpu.memory_space<smem>>) -> (i32, i32) {
    %c0_i32 = arith.constant 0 : i32
    %c0_i32_0 = arith.constant 0 : i32
    %c0_i32_1 = arith.constant 0 : i32
    return %c0_i32, %c0_i32_0 : i32, i32
  }
  func.func @transform_14(%arg0: i32, %arg1: memref<24xi32, #tpu.memory_space<smem>>) -> (i32, i32) {
    %c0_i32 = arith.constant 0 : i32
    %c0_i32_0 = arith.constant 0 : i32
    %c0_i32_1 = arith.constant 0 : i32
    return %c0_i32, %c0_i32_0 : i32, i32
  }
  func.func @transform_15(%arg0: i32, %arg1: memref<24xi32, #tpu.memory_space<smem>>) -> (i32, i32) {
    %c0_i32 = arith.constant 0 : i32
    %c0_i32_0 = arith.constant 0 : i32
    %c0_i32_1 = arith.constant 0 : i32
    return %c0_i32, %c0_i32_0 : i32, i32
  }
  func.func @transform_16(%arg0: i32, %arg1: memref<24xi32, #tpu.memory_space<smem>>) -> (i32, i32) {
    %c0_i32 = arith.constant 0 : i32
    %c0_i32_0 = arith.constant 0 : i32
    %c0_i32_1 = arith.constant 0 : i32
    return %c0_i32, %c0_i32_0 : i32, i32
  }
  func.func @transform_17(%arg0: i32, %arg1: memref<24xi32, #tpu.memory_space<smem>>) -> (i32, i32) {
    %c0_i32 = arith.constant 0 : i32
    %c0_i32_0 = arith.constant 0 : i32
    %c0_i32_1 = arith.constant 0 : i32
    return %c0_i32, %c0_i32_0 : i32, i32
  }
  func.func @transform_18(%arg0: i32, %arg1: memref<24xi32, #tpu.memory_space<smem>>) -> (i32, i32) {
    %c0_i32 = arith.constant 0 : i32
    %c0_i32_0 = arith.constant 0 : i32
    %c0_i32_1 = arith.constant 0 : i32
    return %c0_i32, %c0_i32_0 : i32, i32
  }
  func.func @transform_19(%arg0: i32, %arg1: memref<24xi32, #tpu.memory_space<smem>>) -> (i32, i32) {
    %c0_i32 = arith.constant 0 : i32
    %c0_i32_0 = arith.constant 0 : i32
    %c0_i32_1 = arith.constant 0 : i32
    return %c0_i32, %c0_i32_0 : i32, i32
  }
  func.func @transform_20(%arg0: i32, %arg1: memref<24xi32, #tpu.memory_space<smem>>) -> (i32, i32) {
    %c0_i32 = arith.constant 0 : i32
    %c0_i32_0 = arith.constant 0 : i32
    %c0_i32_1 = arith.constant 0 : i32
    return %c0_i32, %c0_i32_0 : i32, i32
  }
  func.func @transform_21(%arg0: i32, %arg1: memref<24xi32, #tpu.memory_space<smem>>) -> (i32, i32) {
    %c0_i32 = arith.constant 0 : i32
    %c0_i32_0 = arith.constant 0 : i32
    %c0_i32_1 = arith.constant 0 : i32
    return %c0_i32, %c0_i32_0 : i32, i32
  }
  func.func @transform_22(%arg0: i32, %arg1: memref<24xi32, #tpu.memory_space<smem>>) -> (i32, i32) {
    %c0_i32 = arith.constant 0 : i32
    %c0_i32_0 = arith.constant 0 : i32
    %c0_i32_1 = arith.constant 0 : i32
    return %c0_i32, %c0_i32_0 : i32, i32
  }
  func.func @transform_23(%arg0: i32, %arg1: memref<24xi32, #tpu.memory_space<smem>>) -> (i32, i32) {
    %c0_i32 = arith.constant 0 : i32
    %c0_i32_0 = arith.constant 0 : i32
    %c0_i32_1 = arith.constant 0 : i32
    return %c0_i32, %c0_i32_0 : i32, i32
  }
  func.func @transform_24(%arg0: i32, %arg1: memref<24xi32, #tpu.memory_space<smem>>) -> (i32, i32) {
    %c0_i32 = arith.constant 0 : i32
    %c0_i32_0 = arith.constant 0 : i32
    %c0_i32_1 = arith.constant 0 : i32
    return %c0_i32, %c0_i32_0 : i32, i32
  }
}

</mosaic_0001>

<llo_original>
// kernel: feature_loss.1
$region0: #{feature_loss.1}
  #allocation0 [shape = 'u32[]', space=smem, size = 0x4, offset = 0x4, fixed_abs, tag = 'smem constant byte address 0x4 - core index']
  #allocation1 [shape = 'u32[144,128]{1,0:T(1,128)}', space=vmem, size = 0x12000, scoped, tag = 'internal scratch']
  #allocation2 [shape = 's32[1]{0}', space=sflag, size = 0x4, scoped, tag = 'scoped memory for feature_loss.1']
  #allocation3 [shape = 'u8[512]{0}', space=smem, size = 0x200, scoped, tag = 'prefetched SMEM operand 0']
  %s0 = inlined_call_operand.vmem [shape: s32[24], index: 0, kind: input, shape index: {}]
  %s1 = inlined_call_operand.vmem [shape: f32[16,128], index: 1, kind: input, shape index: {}]
  %s2 = inlined_call_operand.vmem [shape: f32[16,128], index: 2, kind: input, shape index: {}]
  %s3 = inlined_call_operand.vmem [shape: f32[16,128], index: 3, kind: input, shape index: {}]
  %s4 = inlined_call_operand.vmem [shape: f32[16,128], index: 4, kind: input, shape index: {}]
  %s5 = inlined_call_operand.vmem [shape: f32[16,128], index: 5, kind: input, shape index: {}]
  %s6 = inlined_call_operand.vmem [shape: f32[16,128], index: 6, kind: input, shape index: {}]
  %s7 = inlined_call_operand.vmem [shape: f32[16,128], index: 7, kind: input, shape index: {}]
  %s8 = inlined_call_operand.vmem [shape: f32[16,128], index: 8, kind: input, shape index: {}]
  %s9 = inlined_call_operand.vmem [shape: f32[16,128], index: 9, kind: input, shape index: {}]
  %s10 = inlined_call_operand.vmem [shape: f32[16,128], index: 10, kind: input, shape index: {}]
  %s11 = inlined_call_operand.vmem [shape: f32[16,128], index: 11, kind: input, shape index: {}]
  %s12 = inlined_call_operand.vmem [shape: f32[16,128], index: 12, kind: input, shape index: {}]
  %s13 = inlined_call_operand.vmem [shape: f32[16,128], index: 13, kind: input, shape index: {}]
  %s14 = inlined_call_operand.vmem [shape: f32[16,128], index: 14, kind: input, shape index: {}]
  %s15 = inlined_call_operand.vmem [shape: f32[16,128], index: 15, kind: input, shape index: {}]
  %s16 = inlined_call_operand.vmem [shape: f32[16,128], index: 16, kind: input, shape index: {}]
  %s17 = inlined_call_operand.vmem [shape: f32[16,128], index: 17, kind: input, shape index: {}]
  %s18 = inlined_call_operand.vmem [shape: f32[16,128], index: 18, kind: input, shape index: {}]
  %s19 = inlined_call_operand.vmem [shape: f32[16,128], index: 19, kind: input, shape index: {}]
  %s20 = inlined_call_operand.vmem [shape: f32[16,128], index: 20, kind: input, shape index: {}]
  %s21 = inlined_call_operand.vmem [shape: f32[16,128], index: 21, kind: input, shape index: {}]
  %s22 = inlined_call_operand.vmem [shape: f32[16,128], index: 22, kind: input, shape index: {}]
  %s23 = inlined_call_operand.vmem [shape: f32[16,128], index: 23, kind: input, shape index: {}]
  %s24 = inlined_call_operand.vmem [shape: f32[16,128], index: 24, kind: input, shape index: {}]
  %s25 = inlined_call_operand.hbm [shape: f32[1,128], index: 25, kind: output, shape index: {}]
  %s26 = sld [smem:[#allocation0]]
  $region106: #{feature_loss.1} parent=0
    _
  %s28 = ssub.s32 1, %s26
  %s29 = scalar_select 0, %s28, %s26
  %s30 = sshll.u32 %s0, 4
  %s31 = int_to_ptr.vmem [resolvable:$true] %s30
  %33 = dma.vmem_to_smem %s31, 16, [#allocation3], [#allocation2]
  %34 = dma.done [#allocation2], 16
  %35 = sfence
  $region1: #{feature_loss.1} parent=0
    #allocation4 [shape = 'u8[512]{0}', space=vmem, size = 0x400, scoped, tag = 'output window, operand 0, single buffered']
    #allocation5 [shape = 's32[1]{0}', space=sflag, size = 0x4, scoped, tag = 'scoped memory for feature_loss.1']
    %36 = vsyncpa [#allocation5], 0
    // Predicated region
    $region2: #{feature_loss.1} parent=1 // pred_check
      _
    $region3: #{feature_loss.1} parent=1 // pred_check_branch
      %38 = sbr.rel (0) target = $region5
    $region4: #{feature_loss.1} parent=1 // pred_region
      _
    $region5: #{feature_loss.1} parent=1 // pred_fallthru
      _
    // Predicated region
    $region6: #{feature_loss.1} parent=1 // pred_check
      _
    $region7: #{feature_loss.1} parent=1 // pred_check_branch
      %40 = sbr.rel (0) target = $region9
    $region8: #{feature_loss.1} parent=1 // pred_region
      _
    $region9: #{feature_loss.1} parent=1 // pred_fallthru
      _
    // Predicated region
    $region10: #{feature_loss.1} parent=1 // pred_check
      _
    $region11: #{feature_loss.1} parent=1 // pred_check_branch
      %42 = sbr.rel (0) target = $region13
    $region12: #{feature_loss.1} parent=1 // pred_region
      _
    $region13: #{feature_loss.1} parent=1 // pred_fallthru
      _
    // Predicated region
    $region14: #{feature_loss.1} parent=1 // pred_check
      _
    $region15: #{feature_loss.1} parent=1 // pred_check_branch
      %44 = sbr.rel (0) target = $region17
    $region16: #{feature_loss.1} parent=1 // pred_region
      _
    $region17: #{feature_loss.1} parent=1 // pred_fallthru
      _
    // Predicated region
    $region18: #{feature_loss.1} parent=1 // pred_check
      _
    $region19: #{feature_loss.1} parent=1 // pred_check_branch
      %46 = sbr.rel (0) target = $region21
    $region20: #{feature_loss.1} parent=1 // pred_region
      _
    $region21: #{feature_loss.1} parent=1 // pred_fallthru
      _
    // Predicated region
    $region22: #{feature_loss.1} parent=1 // pred_check
      _
    $region23: #{feature_loss.1} parent=1 // pred_check_branch
      %48 = sbr.rel (0) target = $region25
    $region24: #{feature_loss.1} parent=1 // pred_region
      _
    $region25: #{feature_loss.1} parent=1 // pred_fallthru
      _
    // Predicated region
    $region26: #{feature_loss.1} parent=1 // pred_check
      _
    $region27: #{feature_loss.1} parent=1 // pred_check_branch
      %50 = sbr.rel (0) target = $region29
    $region28: #{feature_loss.1} parent=1 // pred_region
      _
    $region29: #{feature_loss.1} parent=1 // pred_fallthru
      _
    // Predicated region
    $region30: #{feature_loss.1} parent=1 // pred_check
      _
    $region31: #{feature_loss.1} parent=1 // pred_check_branch
      %52 = sbr.rel (0) target = $region33
    $region32: #{feature_loss.1} parent=1 // pred_region
      _
    $region33: #{feature_loss.1} parent=1 // pred_fallthru
      _
    // Predicated region
    $region34: #{feature_loss.1} parent=1 // pred_check
      _
    $region35: #{feature_loss.1} parent=1 // pred_check_branch
      %54 = sbr.rel (0) target = $region37
    $region36: #{feature_loss.1} parent=1 // pred_region
      _
    $region37: #{feature_loss.1} parent=1 // pred_fallthru
      _
    // Predicated region
    $region38: #{feature_loss.1} parent=1 // pred_check
      _
    $region39: #{feature_loss.1} parent=1 // pred_check_branch
      %56 = sbr.rel (0) target = $region41
    $region40: #{feature_loss.1} parent=1 // pred_region
      _
    $region41: #{feature_loss.1} parent=1 // pred_fallthru
      _
    // Predicated region
    $region42: #{feature_loss.1} parent=1 // pred_check
      _
    $region43: #{feature_loss.1} parent=1 // pred_check_branch
      %58 = sbr.rel (0) target = $region45
    $region44: #{feature_loss.1} parent=1 // pred_region
      _
    $region45: #{feature_loss.1} parent=1 // pred_fallthru
      _
    // Predicated region
    $region46: #{feature_loss.1} parent=1 // pred_check
      _
    $region47: #{feature_loss.1} parent=1 // pred_check_branch
      %60 = sbr.rel (0) target = $region49
    $region48: #{feature_loss.1} parent=1 // pred_region
      _
    $region49: #{feature_loss.1} parent=1 // pred_fallthru
      _
    // Predicated region
    $region50: #{feature_loss.1} parent=1 // pred_check
      _
    $region51: #{feature_loss.1} parent=1 // pred_check_branch
      %62 = sbr.rel (0) target = $region53
    $region52: #{feature_loss.1} parent=1 // pred_region
      _
    $region53: #{feature_loss.1} parent=1 // pred_fallthru
      _
    // Predicated region
    $region54: #{feature_loss.1} parent=1 // pred_check
      _
    $region55: #{feature_loss.1} parent=1 // pred_check_branch
      %64 = sbr.rel (0) target = $region57
    $region56: #{feature_loss.1} parent=1 // pred_region
      _
    $region57: #{feature_loss.1} parent=1 // pred_fallthru
      _
    // Predicated region
    $region58: #{feature_loss.1} parent=1 // pred_check
      _
    $region59: #{feature_loss.1} parent=1 // pred_check_branch
      %66 = sbr.rel (0) target = $region61
    $region60: #{feature_loss.1} parent=1 // pred_region
      _
    $region61: #{feature_loss.1} parent=1 // pred_fallthru
      _
    // Predicated region
    $region62: #{feature_loss.1} parent=1 // pred_check
      _
    $region63: #{feature_loss.1} parent=1 // pred_check_branch
      %68 = sbr.rel (0) target = $region65
    $region64: #{feature_loss.1} parent=1 // pred_region
      _
    $region65: #{feature_loss.1} parent=1 // pred_fallthru
      _
    // Predicated region
    $region66: #{feature_loss.1} parent=1 // pred_check
      _
    $region67: #{feature_loss.1} parent=1 // pred_check_branch
      %70 = sbr.rel (0) target = $region69
    $region68: #{feature_loss.1} parent=1 // pred_region
      _
    $region69: #{feature_loss.1} parent=1 // pred_fallthru
      _
    // Predicated region
    $region70: #{feature_loss.1} parent=1 // pred_check
      _
    $region71: #{feature_loss.1} parent=1 // pred_check_branch
      %72 = sbr.rel (0) target = $region73
    $region72: #{feature_loss.1} parent=1 // pred_region
      _
    $region73: #{feature_loss.1} parent=1 // pred_fallthru
      _
    // Predicated region
    $region74: #{feature_loss.1} parent=1 // pred_check
      _
    $region75: #{feature_loss.1} parent=1 // pred_check_branch
      %74 = sbr.rel (0) target = $region77
    $region76: #{feature_loss.1} parent=1 // pred_region
      _
    $region77: #{feature_loss.1} parent=1 // pred_fallthru
      _
    // Predicated region
    $region78: #{feature_loss.1} parent=1 // pred_check
      _
    $region79: #{feature_loss.1} parent=1 // pred_check_branch
      %76 = sbr.rel (0) target = $region81
    $region80: #{feature_loss.1} parent=1 // pred_region
      _
    $region81: #{feature_loss.1} parent=1 // pred_fallthru
      _
    // Predicated region
    $region82: #{feature_loss.1} parent=1 // pred_check
      _
    $region83: #{feature_loss.1} parent=1 // pred_check_branch
      %78 = sbr.rel (0) target = $region85
    $region84: #{feature_loss.1} parent=1 // pred_region
      _
    $region85: #{feature_loss.1} parent=1 // pred_fallthru
      _
    // Predicated region
    $region86: #{feature_loss.1} parent=1 // pred_check
      _
    $region87: #{feature_loss.1} parent=1 // pred_check_branch
      %80 = sbr.rel (0) target = $region89
    $region88: #{feature_loss.1} parent=1 // pred_region
      _
    $region89: #{feature_loss.1} parent=1 // pred_fallthru
      _
    // Predicated region
    $region90: #{feature_loss.1} parent=1 // pred_check
      _
    $region91: #{feature_loss.1} parent=1 // pred_check_branch
      %82 = sbr.rel (0) target = $region93
    $region92: #{feature_loss.1} parent=1 // pred_region
      _
    $region93: #{feature_loss.1} parent=1 // pred_fallthru
      _
    // Predicated region
    $region94: #{feature_loss.1} parent=1 // pred_check
      _
    $region95: #{feature_loss.1} parent=1 // pred_check_branch
      %84 = sbr.rel (0) target = $region97
    $region96: #{feature_loss.1} parent=1 // pred_region
      _
    $region97: #{feature_loss.1} parent=1 // pred_fallthru
      _
    %v85 = vlaneseq
    %v86 = vand.u32 %v85, 127
    %v87 = vlaneseq
    %v88 = vshrl.u32 %v87, 7
    %v89 = vadd.s32 %v88, 8
    %v90 = vld [vmem:[%s1] sm:$0xff]
    %v91 = vld [vmem:[%s1 + $0x8] sm:$0xff]
    %v92 = vld [vmem:[%s13] sm:$0xff]
    %v93 = vld [vmem:[%s13 + $0x8] sm:$0xff]
    %v94 = vsub.f32 %v90, %v92
    %v95 = vsub.f32 %v91, %v93
    %v96 = vand.u32 2147483647, %v94
    %v97 = vand.u32 2147483647, %v95
    %v98 = vand.u32 %v86, 63
    %s99 = sld [smem:[#allocation3]]
    %v100 = vstv %s99
    %vm101 = vcmp.ge.s32.totalorder %v88, 8
    %vm102 = vcmp.ge.s32.totalorder %v89, 8
    %s103 = sld [smem:[#allocation3 + $0x1]]
    %v104 = vstv %s103
    %v105 = vsel %vm101, %v104, %v100
    %v106 = vsel %vm102, %v104, %v100
    %vm107 = vcmp.lt.s32.totalorder %v98, %v105
    %vm108 = vcmp.lt.s32.totalorder %v98, %v106
    %v109 = vsel %vm107, %v96, 0.0
    %v110 = vsel %vm108, %v97, 0.0
    %v111 = vadd.f32 %v109, %v110
    %112 = vadd.xlane.f32.xlu0 %v111
    %v113 = vpop.xlane.xlu0 %112
    %v114 = vrot.slane %v113, 4
    %v115 = vadd.f32 %v113, %v114
    %v116 = vrot.slane %v115, 2
    %v117 = vadd.f32 %v115, %v116
    %v118 = vrot.slane %v117, 1
    %v119 = vadd.f32 %v117, %v118
    %s120 = vtos %v119
    %s121 = sadd.s32 %s99, %s103
    %s122 = scvt.s32.f32 %s121
    %v123 = vstv %s122
    %v124 = vrcp.pop %v123
    %s125 = vtos %v124
    %s126 = smul.f32 %s120, %s125
    %s127 = sadd.f32 %s126, 0.0
    %v128 = vld [vmem:[%s2] sm:$0xff]
    %v129 = vld [vmem:[%s2 + $0x8] sm:$0xff]
    %v130 = vld [vmem:[%s14] sm:$0xff]
    %v131 = vld [vmem:[%s14 + $0x8] sm:$0xff]
    %v132 = vsub.f32 %v128, %v130
    %v133 = vsub.f32 %v129, %v131
    %v134 = vand.u32 2147483647, %v132
    %v135 = vand.u32 2147483647, %v133
    %v136 = vand.u32 %v86, 31
    %s137 = sld [smem:[#allocation3 + $0x2]]
    %v138 = vstv %s137
    %s139 = sld [smem:[#allocation3 + $0x3]]
    %v140 = vstv %s139
    %v141 = vsel %vm101, %v140, %v138
    %v142 = vsel %vm102, %v140, %v138
    %vm143 = vcmp.lt.s32.totalorder %v136, %v141
    %vm144 = vcmp.lt.s32.totalorder %v136, %v142
    %v145 = vsel %vm143, %v134, 0.0
    %v146 = vsel %vm144, %v135, 0.0
    %v147 = vadd.f32 %v145, %v146
    %148 = vadd.xlane.f32.xlu0 %v147
    %v149 = vpop.xlane.xlu0 %148
    %v150 = vrot.slane %v149, 4
    %v151 = vadd.f32 %v149, %v150
    %v152 = vrot.slane %v151, 2
    %v153 = vadd.f32 %v151, %v152
    %v154 = vrot.slane %v153, 1
    %v155 = vadd.f32 %v153, %v154
    %s156 = vtos %v155
    %s157 = sadd.s32 %s137, %s139
    %s158 = scvt.s32.f32 %s157
    %v159 = vstv %s158
    %v160 = vrcp.pop %v159
    %s161 = vtos %v160
    %s162 = smul.f32 %s156, %s161
    %s163 = sadd.f32 %s127, %s162
    %v164 = vld [vmem:[%s3] sm:$0xff]
    %v165 = vld [vmem:[%s3 + $0x8] sm:$0xff]
    %v166 = vld [vmem:[%s15] sm:$0xff]
    %v167 = vld [vmem:[%s15 + $0x8] sm:$0xff]
    %v168 = vsub.f32 %v164, %v166
    %v169 = vsub.f32 %v165, %v167
    %v170 = vand.u32 2147483647, %v168
    %v171 = vand.u32 2147483647, %v169
    %v172 = vand.u32 %v86, 15
    %s173 = sld [smem:[#allocation3 + $0x4]]
    %v174 = vstv %s173
    %s175 = sld [smem:[#allocation3 + $0x5]]
    %v176 = vstv %s175
    %v177 = vsel %vm101, %v176, %v174
    %v178 = vsel %vm102, %v176, %v174
    %vm179 = vcmp.lt.s32.totalorder %v172, %v177
    %vm180 = vcmp.lt.s32.totalorder %v172, %v178
    %v181 = vsel %vm179, %v170, 0.0
    %v182 = vsel %vm180, %v171, 0.0
    %v183 = vadd.f32 %v181, %v182
    %184 = vadd.xlane.f32.xlu0 %v183
    %v185 = vpop.xlane.xlu0 %184
    %v186 = vrot.slane %v185, 4
    %v187 = vadd.f32 %v185, %v186
    %v188 = vrot.slane %v187, 2
    %v189 = vadd.f32 %v187, %v188
    %v190 = vrot.slane %v189, 1
    %v191 = vadd.f32 %v189, %v190
    %s192 = vtos %v191
    %s193 = sadd.s32 %s173, %s175
    %s194 = scvt.s32.f32 %s193
    %v195 = vstv %s194
    %v196 = vrcp.pop %v195
    %s197 = vtos %v196
    %s198 = smul.f32 %s192, %s197
    %s199 = sadd.f32 %s163, %s198
    %v200 = vld [vmem:[%s4] sm:$0xff]
    %v201 = vld [vmem:[%s4 + $0x8] sm:$0xff]
    %v202 = vld [vmem:[%s16] sm:$0xff]
    %v203 = vld [vmem:[%s16 + $0x8] sm:$0xff]
    %v204 = vsub.f32 %v200, %v202
    %v205 = vsub.f32 %v201, %v203
    %v206 = vand.u32 2147483647, %v204
    %v207 = vand.u32 2147483647, %v205
    %v208 = vand.u32 %v86, 7
    %s209 = sld [smem:[#allocation3 + $0x6]]
    %v210 = vstv %s209
    %s211 = sld [smem:[#allocation3 + $0x7]]
    %v212 = vstv %s211
    %v213 = vsel %vm101, %v212, %v210
    %v214 = vsel %vm102, %v212, %v210
    %vm215 = vcmp.lt.s32.totalorder %v208, %v213
    %vm216 = vcmp.lt.s32.totalorder %v208, %v214
    %v217 = vsel %vm215, %v206, 0.0
    %v218 = vsel %vm216, %v207, 0.0
    %v219 = vadd.f32 %v217, %v218
    %220 = vadd.xlane.f32.xlu0 %v219
    %v221 = vpop.xlane.xlu0 %220
    %v222 = vrot.slane %v221, 4
    %v223 = vadd.f32 %v221, %v222
    %v224 = vrot.slane %v223, 2
    %v225 = vadd.f32 %v223, %v224
    %v226 = vrot.slane %v225, 1
    %v227 = vadd.f32 %v225, %v226
    %s228 = vtos %v227
    %s229 = sadd.s32 %s209, %s211
    %s230 = scvt.s32.f32 %s229
    %v231 = vstv %s230
    %v232 = vrcp.pop %v231
    %s233 = vtos %v232
    %s234 = smul.f32 %s228, %s233
    %s235 = sadd.f32 %s199, %s234
    %v236 = vld [vmem:[%s5] sm:$0xff]
    %v237 = vld [vmem:[%s5 + $0x8] sm:$0xff]
    %v238 = vld [vmem:[%s17] sm:$0xff]
    %v239 = vld [vmem:[%s17 + $0x8] sm:$0xff]
    %v240 = vsub.f32 %v236, %v238
    %v241 = vsub.f32 %v237, %v239
    %v242 = vand.u32 2147483647, %v240
    %v243 = vand.u32 2147483647, %v241
    %s244 = sld [smem:[#allocation3 + $0x8]]
    %v245 = vstv %s244
    %s246 = sld [smem:[#allocation3 + $0x9]]
    %v247 = vstv %s246
    %v248 = vsel %vm101, %v247, %v245
    %v249 = vsel %vm102, %v247, %v245
    %vm250 = vcmp.lt.s32.totalorder %v98, %v248
    %vm251 = vcmp.lt.s32.totalorder %v98, %v249
    %v252 = vsel %vm250, %v242, 0.0
    %v253 = vsel %vm251, %v243, 0.0
    %v254 = vadd.f32 %v252, %v253
    %255 = vadd.xlane.f32.xlu0 %v254
    %v256 = vpop.xlane.xlu0 %255
    %v257 = vrot.slane %v256, 4
    %v258 = vadd.f32 %v256, %v257
    %v259 = vrot.slane %v258, 2
    %v260 = vadd.f32 %v258, %v259
    %v261 = vrot.slane %v260, 1
    %v262 = vadd.f32 %v260, %v261
    %s263 = vtos %v262
    %s264 = sadd.s32 %s244, %s246
    %s265 = scvt.s32.f32 %s264
    %v266 = vstv %s265
    %v267 = vrcp.pop %v266
    %s268 = vtos %v267
    %s269 = smul.f32 %s263, %s268
    %s270 = sadd.f32 %s235, %s269
    %v271 = vld [vmem:[%s6] sm:$0xff]
    %v272 = vld [vmem:[%s6 + $0x8] sm:$0xff]
    %v273 = vld [vmem:[%s18] sm:$0xff]
    %v274 = vld [vmem:[%s18 + $0x8] sm:$0xff]
    %v275 = vsub.f32 %v271, %v273
    %v276 = vsub.f32 %v272, %v274
    %v277 = vand.u32 2147483647, %v275
    %v278 = vand.u32 2147483647, %v276
    %s279 = sld [smem:[#allocation3 + $0xa]]
    %v280 = vstv %s279
    %s281 = sld [smem:[#allocation3 + $0xb]]
    %v282 = vstv %s281
    %v283 = vsel %vm101, %v282, %v280
    %v284 = vsel %vm102, %v282, %v280
    %vm285 = vcmp.lt.s32.totalorder %v136, %v283
    %vm286 = vcmp.lt.s32.totalorder %v136, %v284
    %v287 = vsel %vm285, %v277, 0.0
    %v288 = vsel %vm286, %v278, 0.0
    %v289 = vadd.f32 %v287, %v288
    %290 = vadd.xlane.f32.xlu0 %v289
    %v291 = vpop.xlane.xlu0 %290
    %v292 = vrot.slane %v291, 4
    %v293 = vadd.f32 %v291, %v292
    %v294 = vrot.slane %v293, 2
    %v295 = vadd.f32 %v293, %v294
    %v296 = vrot.slane %v295, 1
    %v297 = vadd.f32 %v295, %v296
    %s298 = vtos %v297
    %s299 = sadd.s32 %s279, %s281
    %s300 = scvt.s32.f32 %s299
    %v301 = vstv %s300
    %v302 = vrcp.pop %v301
    %s303 = vtos %v302
    %s304 = smul.f32 %s298, %s303
    %s305 = sadd.f32 %s270, %s304
    %v306 = vld [vmem:[%s7] sm:$0xff]
    %v307 = vld [vmem:[%s7 + $0x8] sm:$0xff]
    %v308 = vld [vmem:[%s19] sm:$0xff]
    %v309 = vld [vmem:[%s19 + $0x8] sm:$0xff]
    %v310 = vsub.f32 %v306, %v308
    %v311 = vsub.f32 %v307, %v309
    %v312 = vand.u32 2147483647, %v310
    %v313 = vand.u32 2147483647, %v311
    %s314 = sld [smem:[#allocation3 + $0xc]]
    %v315 = vstv %s314
    %s316 = sld [smem:[#allocation3 + $0xd]]
    %v317 = vstv %s316
    %v318 = vsel %vm101, %v317, %v315
    %v319 = vsel %vm102, %v317, %v315
    %vm320 = vcmp.lt.s32.totalorder %v172, %v318
    %vm321 = vcmp.lt.s32.totalorder %v172, %v319
    %v322 = vsel %vm320, %v312, 0.0
    %v323 = vsel %vm321, %v313, 0.0
    %v324 = vadd.f32 %v322, %v323
    %325 = vadd.xlane.f32.xlu0 %v324
    %v326 = vpop.xlane.xlu0 %325
    %v327 = vrot.slane %v326, 4
    %v328 = vadd.f32 %v326, %v327
    %v329 = vrot.slane %v328, 2
    %v330 = vadd.f32 %v328, %v329
    %v331 = vrot.slane %v330, 1
    %v332 = vadd.f32 %v330, %v331
    %s333 = vtos %v332
    %s334 = sadd.s32 %s314, %s316
    %s335 = scvt.s32.f32 %s334
    %v336 = vstv %s335
    %v337 = vrcp.pop %v336
    %s338 = vtos %v337
    %s339 = smul.f32 %s333, %s338
    %s340 = sadd.f32 %s305, %s339
    %v341 = vld [vmem:[%s8] sm:$0xff]
    %v342 = vld [vmem:[%s8 + $0x8] sm:$0xff]
    %v343 = vld [vmem:[%s20] sm:$0xff]
    %v344 = vld [vmem:[%s20 + $0x8] sm:$0xff]
    %v345 = vsub.f32 %v341, %v343
    %v346 = vsub.f32 %v342, %v344
    %v347 = vand.u32 2147483647, %v345
    %v348 = vand.u32 2147483647, %v346
    %s349 = sld [smem:[#allocation3 + $0xe]]
    %v350 = vstv %s349
    %s351 = sld [smem:[#allocation3 + $0xf]]
    %v352 = vstv %s351
    %v353 = vsel %vm101, %v352, %v350
    %v354 = vsel %vm102, %v352, %v350
    %vm355 = vcmp.lt.s32.totalorder %v208, %v353
    %vm356 = vcmp.lt.s32.totalorder %v208, %v354
    %v357 = vsel %vm355, %v347, 0.0
    %v358 = vsel %vm356, %v348, 0.0
    %v359 = vadd.f32 %v357, %v358
    %360 = vadd.xlane.f32.xlu0 %v359
    %v361 = vpop.xlane.xlu0 %360
    %v362 = vrot.slane %v361, 4
    %v363 = vadd.f32 %v361, %v362
    %v364 = vrot.slane %v363, 2
    %v365 = vadd.f32 %v363, %v364
    %v366 = vrot.slane %v365, 1
    %v367 = vadd.f32 %v365, %v366
    %s368 = vtos %v367
    %s369 = sadd.s32 %s349, %s351
    %s370 = scvt.s32.f32 %s369
    %v371 = vstv %s370
    %v372 = vrcp.pop %v371
    %s373 = vtos %v372
    %s374 = smul.f32 %s368, %s373
    %s375 = sadd.f32 %s340, %s374
    %v376 = vld [vmem:[%s9] sm:$0xff]
    %v377 = vld [vmem:[%s9 + $0x8] sm:$0xff]
    %v378 = vld [vmem:[%s21] sm:$0xff]
    %v379 = vld [vmem:[%s21 + $0x8] sm:$0xff]
    %v380 = vsub.f32 %v376, %v378
    %v381 = vsub.f32 %v377, %v379
    %v382 = vand.u32 2147483647, %v380
    %v383 = vand.u32 2147483647, %v381
    %s384 = sld [smem:[#allocation3 + $0x10]]
    %v385 = vstv %s384
    %s386 = sld [smem:[#allocation3 + $0x11]]
    %v387 = vstv %s386
    %v388 = vsel %vm101, %v387, %v385
    %v389 = vsel %vm102, %v387, %v385
    %vm390 = vcmp.lt.s32.totalorder %v98, %v388
    %vm391 = vcmp.lt.s32.totalorder %v98, %v389
    %v392 = vsel %vm390, %v382, 0.0
    %v393 = vsel %vm391, %v383, 0.0
    %v394 = vadd.f32 %v392, %v393
    %395 = vadd.xlane.f32.xlu0 %v394
    %v396 = vpop.xlane.xlu0 %395
    %v397 = vrot.slane %v396, 4
    %v398 = vadd.f32 %v396, %v397
    %v399 = vrot.slane %v398, 2
    %v400 = vadd.f32 %v398, %v399
    %v401 = vrot.slane %v400, 1
    %v402 = vadd.f32 %v400, %v401
    %s403 = vtos %v402
    %s404 = sadd.s32 %s384, %s386
    %s405 = scvt.s32.f32 %s404
    %v406 = vstv %s405
    %v407 = vrcp.pop %v406
    %s408 = vtos %v407
    %s409 = smul.f32 %s403, %s408
    %s410 = sadd.f32 %s375, %s409
    %v411 = vld [vmem:[%s10] sm:$0xff]
    %v412 = vld [vmem:[%s10 + $0x8] sm:$0xff]
    %v413 = vld [vmem:[%s22] sm:$0xff]
    %v414 = vld [vmem:[%s22 + $0x8] sm:$0xff]
    %v415 = vsub.f32 %v411, %v413
    %v416 = vsub.f32 %v412, %v414
    %v417 = vand.u32 2147483647, %v415
    %v418 = vand.u32 2147483647, %v416
    %s419 = sld [smem:[#allocation3 + $0x12]]
    %v420 = vstv %s419
    %s421 = sld [smem:[#allocation3 + $0x13]]
    %v422 = vstv %s421
    %v423 = vsel %vm101, %v422, %v420
    %v424 = vsel %vm102, %v422, %v420
    %vm425 = vcmp.lt.s32.totalorder %v136, %v423
    %vm426 = vcmp.lt.s32.totalorder %v136, %v424
    %v427 = vsel %vm425, %v417, 0.0
    %v428 = vsel %vm426, %v418, 0.0
    %v429 = vadd.f32 %v427, %v428
    %430 = vadd.xlane.f32.xlu0 %v429
    %v431 = vpop.xlane.xlu0 %430
    %v432 = vrot.slane %v431, 4
    %v433 = vadd.f32 %v431, %v432
    %v434 = vrot.slane %v433, 2
    %v435 = vadd.f32 %v433, %v434
    %v436 = vrot.slane %v435, 1
    %v437 = vadd.f32 %v435, %v436
    %s438 = vtos %v437
    %s439 = sadd.s32 %s419, %s421
    %s440 = scvt.s32.f32 %s439
    %v441 = vstv %s440
    %v442 = vrcp.pop %v441
    %s443 = vtos %v442
    %s444 = smul.f32 %s438, %s443
    %s445 = sadd.f32 %s410, %s444
    %v446 = vld [vmem:[%s11] sm:$0xff]
    %v447 = vld [vmem:[%s11 + $0x8] sm:$0xff]
    %v448 = vld [vmem:[%s23] sm:$0xff]
    %v449 = vld [vmem:[%s23 + $0x8] sm:$0xff]
    %v450 = vsub.f32 %v446, %v448
    %v451 = vsub.f32 %v447, %v449
    %v452 = vand.u32 2147483647, %v450
    %v453 = vand.u32 2147483647, %v451
    %s454 = sld [smem:[#allocation3 + $0x14]]
    %v455 = vstv %s454
    %s456 = sld [smem:[#allocation3 + $0x15]]
    %v457 = vstv %s456
    %v458 = vsel %vm101, %v457, %v455
    %v459 = vsel %vm102, %v457, %v455
    %vm460 = vcmp.lt.s32.totalorder %v172, %v458
    %vm461 = vcmp.lt.s32.totalorder %v172, %v459
    %v462 = vsel %vm460, %v452, 0.0
    %v463 = vsel %vm461, %v453, 0.0
    %v464 = vadd.f32 %v462, %v463
    %465 = vadd.xlane.f32.xlu0 %v464
    %v466 = vpop.xlane.xlu0 %465
    %v467 = vrot.slane %v466, 4
    %v468 = vadd.f32 %v466, %v467
    %v469 = vrot.slane %v468, 2
    %v470 = vadd.f32 %v468, %v469
    %v471 = vrot.slane %v470, 1
    %v472 = vadd.f32 %v470, %v471
    %s473 = vtos %v472
    %s474 = sadd.s32 %s454, %s456
    %s475 = scvt.s32.f32 %s474
    %v476 = vstv %s475
    %v477 = vrcp.pop %v476
    %s478 = vtos %v477
    %s479 = smul.f32 %s473, %s478
    %s480 = sadd.f32 %s445, %s479
    %v481 = vld [vmem:[%s12] sm:$0xff]
    %v482 = vld [vmem:[%s12 + $0x8] sm:$0xff]
    %v483 = vld [vmem:[%s24] sm:$0xff]
    %v484 = vld [vmem:[%s24 + $0x8] sm:$0xff]
    %v485 = vsub.f32 %v481, %v483
    %v486 = vsub.f32 %v482, %v484
    %v487 = vand.u32 2147483647, %v485
    %v488 = vand.u32 2147483647, %v486
    %s489 = sld [smem:[#allocation3 + $0x16]]
    %v490 = vstv %s489
    %s491 = sld [smem:[#allocation3 + $0x17]]
    %v492 = vstv %s491
    %v493 = vsel %vm101, %v492, %v490
    %v494 = vsel %vm102, %v492, %v490
    %vm495 = vcmp.lt.s32.totalorder %v208, %v493
    %vm496 = vcmp.lt.s32.totalorder %v208, %v494
    %v497 = vsel %vm495, %v487, 0.0
    %v498 = vsel %vm496, %v488, 0.0
    %v499 = vadd.f32 %v497, %v498
    %500 = vadd.xlane.f32.xlu0 %v499
    %v501 = vpop.xlane.xlu0 %500
    %v502 = vrot.slane %v501, 4
    %v503 = vadd.f32 %v501, %v502
    %v504 = vrot.slane %v503, 2
    %v505 = vadd.f32 %v503, %v504
    %v506 = vrot.slane %v505, 1
    %v507 = vadd.f32 %v505, %v506
    %s508 = vtos %v507
    %s509 = sadd.s32 %s489, %s491
    %s510 = scvt.s32.f32 %s509
    %v511 = vstv %s510
    %v512 = vrcp.pop %v511
    %s513 = vtos %v512
    %s514 = smul.f32 %s508, %s513
    %s515 = sadd.f32 %s480, %s514
    %s516 = smul.f32 %s515, 0.26666668
    %v517 = vstv %s516
    %518 = vst [vmem:[#allocation4] sm:$0x1] %v517
    // Predicated region
    $region98: #{feature_loss.1} parent=1 // pred_check
      _
    $region99: #{feature_loss.1} parent=1 // pred_check_branch
      %520 = sbr.rel (0) target = $region101
    $region100: #{feature_loss.1} parent=1 // pred_region
      %s522 = ssub.s32 16, 16
      %523 = vsyncadd [#allocation5], %s522
      %s525 = sshll.u32 [#allocation4], 4
      %s526 = int_to_ptr.vmem [resolvable:$true] %s525
      %528 = dma.vmem_to_hbm [thread:$0]  %s526, 16, %s25, [#allocation5]
    $region101: #{feature_loss.1} parent=1 // pred_fallthru
      _
    // Predicated region
    $region102: #{feature_loss.1} parent=1 // pred_check
      _
    $region103: #{feature_loss.1} parent=1 // pred_check_branch
      %530 = sbr.rel (0) target = $region105
    $region104: #{feature_loss.1} parent=1 // pred_region
      %531 = dma.done [#allocation5], 16
    $region105: #{feature_loss.1} parent=1 // pred_fallthru
      _
    %532 = vsyncpa [#allocation5], 1

</llo_original>
